<compile_context>
chip_gen: v7x
topology: tpu7x:2x2x1
jax: 0.10.0
libtpu: 0.0.40
codegen_flags: <defaults>
</compile_context>

<pallas_src>
import math

import jax
import jax.numpy as jnp
import numpy as np
from jax.experimental import pallas as pl
from jax.experimental.pallas import tpu as pltpu


def _cdiv(a: int, b: int) -> int:
    return -(-a // b)


def _round_up(x: int, m: int) -> int:
    return _cdiv(x, m) * m


def _fold_factor(d_model: int) -> int:
    """Smallest r such that r * d_model is a multiple of 128 (lane-dense width)."""
    return math.lcm(d_model, 128) // d_model


def _posenc_kernel(sin_a_ref, cos_a_ref, sin_b_ref, cos_b_ref, o_ref):
    """One (tm, w) output tile of the folded sinusoidal table.

    Folded row p = i*tm + j*CHUNK + r   (i = grid step, j = chunk, r in [0, CHUNK)):
        out[p, c] = sin(p*F[c] + P[c])
                  = sinA[r, c]*cosB[q, c] + cosA[r, c]*sinB[q, c],  q = p // CHUNK
    sinA/cosA: (CHUNK, w) chunk-local tables (VMEM resident, same block every step).
    sinB/cosB: (n_q, w)  chunk-base tables (VMEM resident); one row picked per chunk.
    """
    i = pl.program_id(0)
    chunk = sin_a_ref.shape[0]
    n_chunks = o_ref.shape[0] // chunk
    sin_a = sin_a_ref[...]                      # (CHUNK, w)
    cos_a = cos_a_ref[...]                      # (CHUNK, w)
    for j in range(n_chunks):                   # static unroll; n_chunks <= ~64
        q = i * n_chunks + j                    # global chunk index (traced scalar)
        sin_b = sin_b_ref[pl.ds(q, 1), :]       # (1, w), broadcasts over sublanes
        cos_b = cos_b_ref[pl.ds(q, 1), :]
        o_ref[j * chunk:(j + 1) * chunk, :] = (
            sin_a * cos_b + cos_a * sin_b).astype(o_ref.dtype)


def positional_encoder(length: int, d_model: int, *, out_dtype=jnp.float32):
    """Equivalent of PositionalEncoder(d_model).forward(length) -> (length, d_model)."""
    assert d_model % 2 == 0, "d_model must be even"
    assert length >= 1

    fold = _fold_factor(d_model)
    w = fold * d_model                           # lane width, multiple of 128
    folded_len = _cdiv(length, fold)             # folded rows actually needed

    # Chunk size: 64 rows by default; grow for very long tables so the resident
    # chunk-base (B) tables stay <= ~1 MiB each.
    chunk = 64
    while chunk < 512 and _cdiv(folded_len, chunk) * w * 4 > (1 << 20):
        chunk *= 2

    # Tile rows: ~2 MiB output blocks (amortizes ~0.35 us/grid-step overhead), but
    # keep >= 4 grid steps when the table is big enough so writeback overlaps compute
    # and v7x's two TensorCores both get work.
    out_bytes_per_row = w * jnp.dtype(out_dtype).itemsize
    tm_budget = max(chunk, ((2 << 20) // out_bytes_per_row) // chunk * chunk)
    tm_steps = _round_up(max(1, _cdiv(folded_len, 4)), chunk)
    tm = max(chunk, min(tm_budget, tm_steps))
    n_steps = _cdiv(folded_len, tm)
    # TODO(synk): nudge n_steps to an even count on v7x for perfectly balanced TC split.
    padded_folded = n_steps * tm                 # grid * block == array, no partial blocks
    n_q = padded_folded // chunk
    padded_len = padded_folded * fold

    # ---- tiny trig tables, float64 on host, rounded once to f32 -------------------
    # inv_freq uses the exact same jnp expression as the reference / PyTorch __init__,
    # so the only remaining mismatch is the reference's own f32 angle rounding
    # (~0.5 ulp of p*inv_freq; < 1e-5 for positions up to a few hundred).
    inv_freq = np.asarray(
        1.0 / (10000.0 ** (jnp.arange(0.0, d_model, 2.0) / d_model))
    ).astype(np.float64)                                       # (d_model//2,)
    col = np.arange(w)
    feat = col % d_model
    off = (col // d_model).astype(np.float64)                  # fold offset per column
    base = inv_freq[feat // 2]                                  # (w,)
    phase = np.where(feat % 2 == 0, 0.0, np.pi / 2.0)           # cos(x) == sin(x + pi/2)
    f_col = fold * base                                         # angle step per folded row
    p_col = off * base + phase                                  # per-column phase

    r = np.arange(chunk, dtype=np.float64)[:, None]
    ang_a = r * f_col[None, :] + p_col[None, :]                 # (chunk, w)
    q = (np.arange(n_q, dtype=np.float64) * chunk)[:, None]
    ang_b = q * f_col[None, :]                                  # (n_q, w)
    sin_a = jnp.asarray(np.sin(ang_a), dtype=jnp.float32)
    cos_a = jnp.asarray(np.cos(ang_a), dtype=jnp.float32)
    sin_b = jnp.asarray(np.sin(ang_b), dtype=jnp.float32)
    cos_b = jnp.asarray(np.cos(ang_b), dtype=jnp.float32)

    table_spec_a = pl.BlockSpec((chunk, w), lambda i: (0, 0))   # resident, fetched once
    table_spec_b = pl.BlockSpec((n_q, w), lambda i: (0, 0))     # resident, fetched once
    out_spec = pl.BlockSpec((tm, w), lambda i: (i, 0))

    cost = pl.CostEstimate(
        flops=3 * padded_folded * w,
        transcendentals=0,
        bytes_accessed=padded_folded * w * jnp.dtype(out_dtype).itemsize
        + 2 * (chunk + n_q) * w * 4,
    )

    folded = pl.pallas_call(
        _posenc_kernel,
        out_shape=jax.ShapeDtypeStruct((padded_folded, w), out_dtype),
        grid=(n_steps,),
        in_specs=[table_spec_a, table_spec_a, table_spec_b, table_spec_b],
        out_specs=out_spec,
        compiler_params=pltpu.CompilerParams(dimension_semantics=("parallel",)),
        cost_estimate=cost,
    )(sin_a, cos_a, sin_b, cos_b)

    # Row-major unfold back to (padded_len, d_model) is a free view; the [:length]
    # slice is a separate XLA op only when padding was added (callers inside a jit
    # that can consume the padded table avoid that extra HBM pass).
    out = folded.reshape(padded_len, d_model)
    if padded_len != length:
        out = out[:length]
    return out


def _reference(length: int, d_model: int):
    """Pure-JAX reference mirroring the PyTorch __init__ construction."""
    pos = jnp.arange(length, dtype=jnp.float32)[:, None]                     # (L, 1)
    inv_freq = 1.0 / (10000.0 ** (jnp.arange(0.0, d_model, 2.0) / d_model))  # (D/2,)
    enc = jnp.zeros((length, d_model), dtype=jnp.float32)
    enc = enc.at[:, 0::2].set(jnp.sin(pos * inv_freq))
    enc = enc.at[:, 1::2].set(jnp.cos(pos * inv_freq))
    return enc


if __name__ == "__main__":
    _ = jax.random.PRNGKey(0)  # forward() has no array inputs; key kept for convention

    seq_len, d_model = 8, 32
    out = jax.block_until_ready(positional_encoder(seq_len, d_model))
    ref = _reference(seq_len, d_model)
    assert out.shape == (seq_len, d_model) and out.dtype == jnp.float32
    assert jnp.allclose(out, ref, atol=1e-5, rtol=1e-5)

    # Length padding (len % fold != 0) and another width, single-tile path.
    for (L, D) in ((10, 32), (40, 64)):
        o = jax.block_until_ready(positional_encoder(L, D))
        assert o.shape == (L, D)
        assert jnp.allclose(o, _reference(L, D), atol=1e-5, rtol=1e-5)

    # Multi-step grids (tiled output, per-tile chunk-base rows).  2e-5 tolerance:
    # for positions of a few hundred the f32 reference itself rounds the angle by
    # ~0.5 ulp of p*inv_freq (~1e-5); the kernel's split-angle result carries <3e-7.
    for (L, D) in ((200, 256), (300, 32)):
        o = jax.block_until_ready(positional_encoder(L, D))
        assert o.shape == (L, D)
        assert jnp.allclose(o, _reference(L, D), atol=2e-5, rtol=0.0)

    # bf16 output path (halves HBM write bytes; compute stays f32, cast at the store).
    o16 = jax.block_until_ready(
        positional_encoder(seq_len, d_model, out_dtype=jnp.bfloat16))
    assert o16.shape == (seq_len, d_model) and o16.dtype == jnp.bfloat16
    assert jnp.allclose(o16.astype(jnp.float32), ref, atol=1e-2)

    print("KERNEL_OK")
</pallas_src>

<mosaic_0001>
module attributes {stable_mosaic.version = 11 : i64} {
  func.func @_posenc_kernel(%arg0: i32, %arg1: memref<64x128xf32, #tpu.memory_space<vmem>>, %arg2: memref<64x128xf32, #tpu.memory_space<vmem>>, %arg3: memref<1x128xf32, #tpu.memory_space<vmem>>, %arg4: memref<1x128xf32, #tpu.memory_space<vmem>>, %arg5: memref<64x128xf32, #tpu.memory_space<vmem>>) attributes {dimension_semantics = [#tpu.dimension_semantics<parallel>], iteration_bounds = array<i64: 1>, scalar_prefetch = 0 : i64, scratch_operands = 0 : i64, tpu.core_type = #tpu.core_type<tc>, window_params = [{pipeline_mode = #tpu.pipeline_mode<synchronous>, transform_indices = @transform_0, window_bounds = array<i64: 64, 128>}, {pipeline_mode = #tpu.pipeline_mode<synchronous>, transform_indices = @transform_1, window_bounds = array<i64: 64, 128>}, {pipeline_mode = #tpu.pipeline_mode<synchronous>, transform_indices = @transform_2, window_bounds = array<i64: 1, 128>}, {pipeline_mode = #tpu.pipeline_mode<synchronous>, transform_indices = @transform_3, window_bounds = array<i64: 1, 128>}, {transform_indices = @transform_4, window_bounds = array<i64: 64, 128>}]} {
    %c0 = arith.constant 0 : index
    %c0_0 = arith.constant 0 : index
    %0 = vector.load %arg1[%c0, %c0_0] : memref<64x128xf32, #tpu.memory_space<vmem>>, vector<64x128xf32>
    %c0_1 = arith.constant 0 : index
    %c0_2 = arith.constant 0 : index
    %1 = vector.load %arg2[%c0_1, %c0_2] : memref<64x128xf32, #tpu.memory_space<vmem>>, vector<64x128xf32>
    %c1_i32 = arith.constant 1 : i32
    %2 = arith.muli %arg0, %c1_i32 : i32
    %c0_i32 = arith.constant 0 : i32
    %3 = arith.addi %2, %c0_i32 : i32
    %4 = arith.index_cast %3 : i32 to index
    %c0_3 = arith.constant 0 : index
    %5 = vector.load %arg3[%4, %c0_3] : memref<1x128xf32, #tpu.memory_space<vmem>>, vector<1x128xf32>
    %6 = arith.index_cast %3 : i32 to index
    %c0_4 = arith.constant 0 : index
    %7 = vector.load %arg4[%6, %c0_4] : memref<1x128xf32, #tpu.memory_space<vmem>>, vector<1x128xf32>
    %8 = vector.broadcast %7 : vector<1x128xf32> to vector<64x128xf32>
    %9 = arith.mulf %0, %8 : vector<64x128xf32>
    %10 = vector.broadcast %5 : vector<1x128xf32> to vector<64x128xf32>
    %11 = arith.mulf %1, %10 : vector<64x128xf32>
    %12 = arith.addf %9, %11 : vector<64x128xf32>
    %c0_5 = arith.constant 0 : index
    %c0_6 = arith.constant 0 : index
    %13 = vector.load %arg5[%c0_5, %c0_6] : memref<64x128xf32, #tpu.memory_space<vmem>>, vector<64x128xf32>
    tpu.vector_store %arg5[%c0_5, %c0_6], %12 {strides = array<i32>} : memref<64x128xf32, #tpu.memory_space<vmem>>, vector<64x128xf32>,
    return
  }
  func.func @transform_0(%arg0: i32) -> (i32, i32) {
    %c0_i32 = arith.constant 0 : i32
    %c0_i32_0 = arith.constant 0 : i32
    %c0_i32_1 = arith.constant 0 : i32
    return %c0_i32, %c0_i32_0 : i32, i32
  }
  func.func @transform_1(%arg0: i32) -> (i32, i32) {
    %c0_i32 = arith.constant 0 : i32
    %c0_i32_0 = arith.constant 0 : i32
    %c0_i32_1 = arith.constant 0 : i32
    return %c0_i32, %c0_i32_0 : i32, i32
  }
  func.func @transform_2(%arg0: i32) -> (i32, i32) {
    %c0_i32 = arith.constant 0 : i32
    %c0_i32_0 = arith.constant 0 : i32
    %c0_i32_1 = arith.constant 0 : i32
    return %c0_i32, %c0_i32_0 : i32, i32
  }
  func.func @transform_3(%arg0: i32) -> (i32, i32) {
    %c0_i32 = arith.constant 0 : i32
    %c0_i32_0 = arith.constant 0 : i32
    %c0_i32_1 = arith.constant 0 : i32
    return %c0_i32, %c0_i32_0 : i32, i32
  }
  func.func @transform_4(%arg0: i32) -> (i32, i32) {
    %c0_i32 = arith.constant 0 : i32
    %c0_i32_0 = arith.constant 0 : i32
    return %arg0, %c0_i32 : i32, i32
  }
}

</mosaic_0001>

<llo_original>
// kernel: tpu_custom_call.1
$region0: #{tpu_custom_call.1}
  #allocation0 [shape = 'u32[]', space=smem, size = 0x4, offset = 0x4, fixed_abs, tag = 'smem constant byte address 0x4 - core index']
  #allocation1 [shape = 'u32[144,128]{1,0:T(1,128)}', space=vmem, size = 0x12000, scoped, tag = 'internal scratch']
  %s0 = inlined_call_operand.hbm [shape: f32[64,128], index: 0, kind: input, shape index: {}]
  %s1 = inlined_call_operand.hbm [shape: f32[64,128], index: 1, kind: input, shape index: {}]
  %s2 = inlined_call_operand.vmem [shape: f32[1,128], index: 2, kind: input, shape index: {}]
  %s3 = inlined_call_operand.vmem [shape: f32[1,128], index: 3, kind: input, shape index: {}]
  %s4 = inlined_call_operand.hbm [shape: f32[64,128], index: 4, kind: output, shape index: {}]
  %s5 = sld [smem:[#allocation0]]
  $region34: #{tpu_custom_call.1} parent=0
    _
  %s7 = ssub.s32 1, %s5
  %s8 = scalar_select 0, %s7, %s5
  $region1: #{tpu_custom_call.1} parent=0
    #allocation2 [shape = 'u8[32768]{0}', space=vmem, size = 0x8000, scoped, tag = 'input window, operand 0, single buffered']
    #allocation3 [shape = 's32[1]{0}', space=sflag, size = 0x4, scoped, tag = 'scoped memory for tpu_custom_call.1']
    #allocation4 [shape = 's32[1]{0}', space=sflag, size = 0x4, scoped, tag = 'scoped memory for tpu_custom_call.1']
    #allocation5 [shape = 'u8[32768]{0}', space=vmem, size = 0x8000, scoped, tag = 'input window, operand 1, single buffered']
    #allocation6 [shape = 's32[1]{0}', space=sflag, size = 0x4, scoped, tag = 'scoped memory for tpu_custom_call.1']
    #allocation7 [shape = 'u8[32768]{0}', space=vmem, size = 0x8000, scoped, tag = 'output window, operand 0, single buffered']
    %9 = vsyncpa [#allocation3], 0
    %10 = vsyncpa [#allocation6], 0
    %11 = vsyncpa [#allocation4], 0
    // Predicated region
    $region2: #{tpu_custom_call.1} parent=1 // pred_check
      _
    $region3: #{tpu_custom_call.1} parent=1 // pred_check_branch
      %13 = sbr.rel (0) target = $region5
    $region4: #{tpu_custom_call.1} parent=1 // pred_region
      %s15 = ssub.s32 1024, 1024
      %16 = vsyncadd [#allocation3], %s15
      %s17 = sshll.u32 [#allocation2], 4
      %s18 = int_to_ptr.vmem [resolvable:$true] %s17
      %23 = dma.hbm_to_vmem [thread:$0]  %s0, 1024, %s18, [#allocation3], 128, 128, 8
    $region5: #{tpu_custom_call.1} parent=1 // pred_fallthru
      _
    // Predicated region
    $region6: #{tpu_custom_call.1} parent=1 // pred_check
      _
    $region7: #{tpu_custom_call.1} parent=1 // pred_check_branch
      %25 = sbr.rel (0) target = $region9
    $region8: #{tpu_custom_call.1} parent=1 // pred_region
      %s27 = ssub.s32 1024, 1024
      %28 = vsyncadd [#allocation6], %s27
      %s29 = sshll.u32 [#allocation5], 4
      %s30 = int_to_ptr.vmem [resolvable:$true] %s29
      %35 = dma.hbm_to_vmem [thread:$0]  %s1, 1024, %s30, [#allocation6], 128, 128, 8
    $region9: #{tpu_custom_call.1} parent=1 // pred_fallthru
      _
    // Predicated region
    $region10: #{tpu_custom_call.1} parent=1 // pred_check
      _
    $region11: #{tpu_custom_call.1} parent=1 // pred_check_branch
      %37 = sbr.rel (0) target = $region13
    $region12: #{tpu_custom_call.1} parent=1 // pred_region
      _
    $region13: #{tpu_custom_call.1} parent=1 // pred_fallthru
      _
    // Predicated region
    $region14: #{tpu_custom_call.1} parent=1 // pred_check
      _
    $region15: #{tpu_custom_call.1} parent=1 // pred_check_branch
      %39 = sbr.rel (0) target = $region17
    $region16: #{tpu_custom_call.1} parent=1 // pred_region
      _
    $region17: #{tpu_custom_call.1} parent=1 // pred_fallthru
      _
    // Predicated region
    $region18: #{tpu_custom_call.1} parent=1 // pred_check
      _
    $region19: #{tpu_custom_call.1} parent=1 // pred_check_branch
      %41 = sbr.rel (0) target = $region21
    $region20: #{tpu_custom_call.1} parent=1 // pred_region
      %42 = dma.done [#allocation3], 1024
    $region21: #{tpu_custom_call.1} parent=1 // pred_fallthru
      _
    // Predicated region
    $region22: #{tpu_custom_call.1} parent=1 // pred_check
      _
    $region23: #{tpu_custom_call.1} parent=1 // pred_check_branch
      %44 = sbr.rel (0) target = $region25
    $region24: #{tpu_custom_call.1} parent=1 // pred_region
      %45 = dma.done [#allocation6], 1024
    $region25: #{tpu_custom_call.1} parent=1 // pred_fallthru
      _
    %v46 = vld [vmem:[#allocation2] sm:$0xff]
    %v47 = vld [vmem:[#allocation2 + $0x8] sm:$0xff]
    %v48 = vld [vmem:[#allocation2 + $0x10] sm:$0xff]
    %v49 = vld [vmem:[#allocation2 + $0x18] sm:$0xff]
    %v50 = vld [vmem:[#allocation2 + $0x20] sm:$0xff]
    %v51 = vld [vmem:[#allocation2 + $0x28] sm:$0xff]
    %v52 = vld [vmem:[#allocation2 + $0x30] sm:$0xff]
    %v53 = vld [vmem:[#allocation2 + $0x38] sm:$0xff]
    %v54 = vld [vmem:[#allocation5] sm:$0xff]
    %v55 = vld [vmem:[#allocation5 + $0x8] sm:$0xff]
    %v56 = vld [vmem:[#allocation5 + $0x10] sm:$0xff]
    %v57 = vld [vmem:[#allocation5 + $0x18] sm:$0xff]
    %v58 = vld [vmem:[#allocation5 + $0x20] sm:$0xff]
    %v59 = vld [vmem:[#allocation5 + $0x28] sm:$0xff]
    %v60 = vld [vmem:[#allocation5 + $0x30] sm:$0xff]
    %v61 = vld [vmem:[#allocation5 + $0x38] sm:$0xff]
    %v62 = vld [vmem:[%s2] sm:$0x1]
    %v63 = vld [vmem:[%s3] sm:$0x1]
    %v65 = vlaneseq
    %v66 = vshrl.u32 %v65, 7
    %v67 = vsub.s32 0, %v66
    %v68 = vrot.slane %v63, %v67
    %v70 = vmul.f32 %v46, %v68
    %v71 = vmul.f32 %v47, %v68
    %v72 = vmul.f32 %v48, %v68
    %v73 = vmul.f32 %v49, %v68
    %v74 = vmul.f32 %v50, %v68
    %v75 = vmul.f32 %v51, %v68
    %v76 = vmul.f32 %v52, %v68
    %v77 = vmul.f32 %v53, %v68
    %v79 = vlaneseq
    %v80 = vshrl.u32 %v79, 7
    %v81 = vsub.s32 0, %v80
    %v82 = vrot.slane %v62, %v81
    %v84 = vmul.f32 %v54, %v82
    %v85 = vmul.f32 %v55, %v82
    %v86 = vmul.f32 %v56, %v82
    %v87 = vmul.f32 %v57, %v82
    %v88 = vmul.f32 %v58, %v82
    %v89 = vmul.f32 %v59, %v82
    %v90 = vmul.f32 %v60, %v82
    %v91 = vmul.f32 %v61, %v82
    %v92 = vadd.f32 %v70, %v84
    %v93 = vadd.f32 %v71, %v85
    %v94 = vadd.f32 %v72, %v86
    %v95 = vadd.f32 %v73, %v87
    %v96 = vadd.f32 %v74, %v88
    %v97 = vadd.f32 %v75, %v89
    %v98 = vadd.f32 %v76, %v90
    %v99 = vadd.f32 %v77, %v91
    %100 = vst [vmem:[#allocation7] sm:$0xff] %v92
    %101 = vst [vmem:[#allocation7 + $0x8] sm:$0xff] %v93
    %102 = vst [vmem:[#allocation7 + $0x10] sm:$0xff] %v94
    %103 = vst [vmem:[#allocation7 + $0x18] sm:$0xff] %v95
    %104 = vst [vmem:[#allocation7 + $0x20] sm:$0xff] %v96
    %105 = vst [vmem:[#allocation7 + $0x28] sm:$0xff] %v97
    %106 = vst [vmem:[#allocation7 + $0x30] sm:$0xff] %v98
    %107 = vst [vmem:[#allocation7 + $0x38] sm:$0xff] %v99
    // Predicated region
    $region26: #{tpu_custom_call.1} parent=1 // pred_check
      _
    $region27: #{tpu_custom_call.1} parent=1 // pred_check_branch
      %109 = sbr.rel (0) target = $region29
    $region28: #{tpu_custom_call.1} parent=1 // pred_region
      %s111 = ssub.s32 1024, 1024
      %112 = vsyncadd [#allocation4], %s111
      %s113 = sshll.u32 [#allocation7], 4
      %s114 = int_to_ptr.vmem [resolvable:$true] %s113
      %119 = dma.vmem_to_hbm [thread:$0]  %s114, 1024, %s4, [#allocation4], 128, 128, 8
    $region29: #{tpu_custom_call.1} parent=1 // pred_fallthru
      _
    // Predicated region
    $region30: #{tpu_custom_call.1} parent=1 // pred_check
      _
    $region31: #{tpu_custom_call.1} parent=1 // pred_check_branch
      %121 = sbr.rel (0) target = $region33
    $region32: #{tpu_custom_call.1} parent=1 // pred_region
      %122 = dma.done [#allocation4], 1024
    $region33: #{tpu_custom_call.1} parent=1 // pred_fallthru
      _
    %123 = vsyncpa [#allocation3], 1
    %124 = vsyncpa [#allocation6], 1
    %125 = vsyncpa [#allocation4], 1

</llo_original>
